<compile_context>
chip_gen: v5e
topology: v5e:2x2
jax: 0.10.0
libtpu: 0.0.40
codegen_flags: <defaults>
</compile_context>

<pallas_src>
import jax
import jax.numpy as jnp
from jax import lax
from jax.experimental import pallas as pl
from jax.experimental.pallas import tpu as pltpu


def _make_kernel(H, W, HWp, Cp, TILE_P):
    """One grid step = one tile of TILE_P output pixels (lane axis)."""

    def kernel(theta_ref, coords_ref, target_ref, movstk_ref, out_ref):
        # theta_ref: SMEM (2, 3) f32.
        t00 = theta_ref[0, 0]; t01 = theta_ref[0, 1]; t02 = theta_ref[0, 2]
        t10 = theta_ref[1, 0]; t11 = theta_ref[1, 1]; t12 = theta_ref[1, 2]

        # coords_ref: (3, TILE_P) = [x_norm ; y_norm ; pixel_valid].
        xn = coords_ref[0:1, :]
        yn = coords_ref[1:2, :]
        pixv = coords_ref[2:3, :]           # 0 on pixels added by HW padding

        # F.affine_grid (align_corners=True): [gx, gy] = theta @ [x, y, 1].
        gx = t00 * xn + t01 * yn + t02
        gy = t10 * xn + t11 * yn + t12

        # F.grid_sample unnormalize (align_corners=True) -> input pixel coords.
        ix = (gx + 1.0) * (0.5 * (W - 1))
        iy = (gy + 1.0) * (0.5 * (H - 1))
        x0f = jnp.floor(ix)
        y0f = jnp.floor(iy)
        wx = ix - x0f
        wy = iy - y0f
        x0 = x0f.astype(jnp.int32)
        y0 = y0f.astype(jnp.int32)

        f32 = jnp.float32
        # Per-corner validity (zeros padding) and the padded-output-pixel mask
        # are folded into the small (1, TILE_P) weights.
        vx0 = (x0 >= 0) & (x0 < W)
        vx1 = (x0 >= -1) & (x0 < W - 1)     # validity of x0 + 1
        vy0 = (y0 >= 0) & (y0 < H)
        vy1 = (y0 >= -1) & (y0 < H - 1)     # validity of y0 + 1
        w00 = (1.0 - wx) * (1.0 - wy) * (vx0 & vy0).astype(f32) * pixv
        w01 = wx * (1.0 - wy) * (vx1 & vy0).astype(f32) * pixv
        w10 = (1.0 - wx) * wy * (vx0 & vy1).astype(f32) * pixv
        w11 = wx * wy * (vx1 & vy1).astype(f32) * pixv

        # Base flattened source index (corner dy=0, dx=0).  Negative bases are
        # wrapped by +HWp so the lane-rolled corner copies still land on the
        # correct flat index when e.g. x0 == -1 but the x0+1 corner is valid;
        # any remaining out-of-range base has all-zero weights, so a cheap
        # clip (instead of an integer mod) is enough to keep the one-hot
        # row index in range.
        base = y0 * W + x0
        base = jnp.where(base < 0, base + HWp, base)
        m00 = jnp.clip(base, 0, HWp - 1)

        # Single one-hot slab for this tile (the only (HWp, TILE_P) VALU work).
        q = lax.broadcasted_iota(jnp.int32, (HWp, TILE_P), 0)
        onehot = (q == m00).astype(f32)

        # Gather all four bilinear corners with one MXU matmul against the
        # stacked [mov, roll(-1), roll(-W), roll(-(W+1))] image.
        g = jnp.dot(movstk_ref[...], onehot,
                    preferred_element_type=jnp.float32)      # (4*Cp, TILE_P)

        warped = (g[0 * Cp:1 * Cp, :] * w00
                  + g[1 * Cp:2 * Cp, :] * w01
                  + g[2 * Cp:3 * Cp, :] * w10
                  + g[3 * Cp:4 * Cp, :] * w11)               # (Cp, TILE_P)

        # L2 image similarity: lane-dense per-pixel partial energies.
        diff = target_ref[...] - warped
        out_ref[...] = jnp.sum(diff * diff, axis=0, keepdims=True)

    return kernel


def affine_intensity_forward(target, moving, affine, translation):
    """target, moving: (C, H, W) float32; affine: (2, 2); translation: (2,)."""
    C, H, W = target.shape
    HW = H * W
    theta = jnp.concatenate(
        [affine, translation[:, None]], axis=1).astype(jnp.float32)

    # Channel pad to a sublane multiple; padded channels are zero in both
    # images so they contribute 0 energy.
    Cp = ((C + 7) // 8) * 8
    # Pixel pad to a lane multiple (and >= 256 so the 'parallel' grid always
    # has >= 2 steps -> both v7x TensorCores get work).  Padded output pixels
    # are masked through the coords validity row.
    HWp = max(((HW + 127) // 128) * 128, 256)

    tgt = jnp.pad(target.reshape(C, HW).astype(jnp.float32),
                  ((0, Cp - C), (0, HWp - HW)))
    mov = jnp.pad(moving.reshape(C, HW).astype(jnp.float32),
                  ((0, Cp - C), (0, HWp - HW)))

    # Stack the four lane-rolled copies of moving (corner offsets 0,1,W,W+1),
    # rolled over the PADDED axis so the in-kernel +HWp wrap of negative base
    # indices stays consistent with the roll wrap.
    mov_stk = jnp.concatenate(
        [mov,
         jnp.roll(mov, -1, axis=1),
         jnp.roll(mov, -W, axis=1),
         jnp.roll(mov, -(W + 1), axis=1)], axis=0)           # (4*Cp, HWp)

    # Normalized base grid (align_corners=True) + output-pixel validity row.
    # TODO(synk): torch's affine_grid returns 0 (not -1) for a size-1 spatial
    # dim with align_corners=True; that degenerate case is not special-cased.
    ys = jnp.linspace(-1.0, 1.0, H, dtype=jnp.float32)
    xs = jnp.linspace(-1.0, 1.0, W, dtype=jnp.float32)
    yn, xn = jnp.meshgrid(ys, xs, indexing="ij")              # (H, W)
    coords = jnp.stack([xn.reshape(-1), yn.reshape(-1),
                        jnp.ones((HW,), jnp.float32)], axis=0)  # (3, HW)
    coords = jnp.pad(coords, ((0, 0), (0, HWp - HW)))         # pad -> valid=0

    # ---- Tile-size selection from a generation-aware VMEM budget. ----------
    try:
        vmem_cap = int(pltpu.get_tpu_info().vmem_capacity_bytes)
    except Exception:
        vmem_cap = 64 * 1024 * 1024          # assume the smallest (v7x per-TC)
    vmem_budget = int(0.75 * vmem_cap)

    def vmem_need(tp):
        slab = 2 * HWp * tp * 4                       # iota + one-hot slabs
        resident = 4 * Cp * HWp * 4                   # single-copy mov_stk
        streams = 2 * (Cp * tp + 8 * tp + tp) * 4     # dbl-buf tgt/coords/out
        misc = 8 * Cp * tp * 4                        # gather/warped/weights
        return slab + resident + streams + misc

    TILE_P = 128
    for t in (1024, 512, 256, 128):
        if HWp % t == 0 and HWp // t >= 2 and vmem_need(t) <= vmem_budget:
            TILE_P = t
            break
    G = HWp // TILE_P

    # Never request the full physical VMEM (leave Mosaic scratch headroom).
    vmem_limit = int(min(max(2 * vmem_need(TILE_P), 16 * 1024 * 1024),
                         int(0.85 * vmem_cap)))

    out = pl.pallas_call(
        _make_kernel(H, W, HWp, Cp, TILE_P),
        out_shape=jax.ShapeDtypeStruct((1, HWp), jnp.float32),
        grid=(G,),
        in_specs=[
            pl.BlockSpec(memory_space=pltpu.MemorySpace.SMEM),     # theta
            pl.BlockSpec((3, TILE_P), lambda i: (0, i)),           # coords
            pl.BlockSpec((Cp, TILE_P), lambda i: (0, i)),          # target
            # Whole stacked-moving image resident once in VMEM (grid-constant,
            # so no double-buffer pair and no per-step re-fetch).
            pl.BlockSpec(memory_space=pltpu.MemorySpace.VMEM),     # mov_stk
        ],
        out_specs=pl.BlockSpec((1, TILE_P), lambda i: (0, i)),
        compiler_params=pltpu.CompilerParams(
            dimension_semantics=("parallel",),
            vmem_limit_bytes=vmem_limit),
    )(theta, coords, tgt, mov_stk)

    return jnp.sum(out)


def reference_forward(target, moving, affine, translation):
    """Pure-JAX reference (direct bilinear gather), same semantics."""
    C, H, W = target.shape
    theta = jnp.concatenate([affine, translation[:, None]], axis=1)
    ys = jnp.linspace(-1.0, 1.0, H)
    xs = jnp.linspace(-1.0, 1.0, W)
    yn, xn = jnp.meshgrid(ys, xs, indexing="ij")
    gx = theta[0, 0] * xn + theta[0, 1] * yn + theta[0, 2]
    gy = theta[1, 0] * xn + theta[1, 1] * yn + theta[1, 2]
    ix = (gx + 1.0) * 0.5 * (W - 1)
    iy = (gy + 1.0) * 0.5 * (H - 1)
    x0 = jnp.floor(ix).astype(jnp.int32)
    y0 = jnp.floor(iy).astype(jnp.int32)
    wx = ix - x0
    wy = iy - y0

    def gather(yc, xc):
        valid = (xc >= 0) & (xc < W) & (yc >= 0) & (yc < H)
        ycc = jnp.clip(yc, 0, H - 1)
        xcc = jnp.clip(xc, 0, W - 1)
        vals = moving[:, ycc, xcc]
        return jnp.where(valid[None], vals, 0.0)

    warped = (gather(y0, x0) * ((1 - wx) * (1 - wy))[None]
              + gather(y0, x0 + 1) * (wx * (1 - wy))[None]
              + gather(y0 + 1, x0) * ((1 - wx) * wy)[None]
              + gather(y0 + 1, x0 + 1) * (wx * wy)[None])
    return jnp.sum((target - warped) ** 2)


if __name__ == "__main__":
    key = jax.random.PRNGKey(0)
    k1, k2, k3, k4, k5, k6, k7, k8 = jax.random.split(key, 8)

    # Case 1: small structured grid (C, H, W) -> HWp=256, TILE_P=128, G=2.
    C, H, W = 4, 16, 16
    target = jax.random.normal(k1, (C, H, W), dtype=jnp.float32)
    moving = jax.random.normal(k2, (C, H, W), dtype=jnp.float32)
    affine = (jnp.eye(2, dtype=jnp.float32)
              + 0.1 * jax.random.normal(k3, (2, 2), dtype=jnp.float32))
    translation = 0.05 * jax.random.normal(k4, (2,), dtype=jnp.float32)

    energy = jax.block_until_ready(
        affine_intensity_forward(target, moving, affine, translation))
    ref = reference_forward(target, moving, affine, translation)
    if not jnp.allclose(energy, ref, rtol=3e-4, atol=1e-2):
        raise AssertionError(f"case1 mismatch: kernel={energy} ref={ref}")

    # Case 2: larger spatial size -> HWp=1024, TILE_P=512, G=2.
    C2, H2, W2 = 3, 32, 32
    target2 = jax.random.normal(k5, (C2, H2, W2), dtype=jnp.float32)
    moving2 = jax.random.normal(k6, (C2, H2, W2), dtype=jnp.float32)
    affine2 = jnp.array([[0.95, 0.12], [-0.08, 1.05]], dtype=jnp.float32)
    translation2 = jnp.array([0.07, -0.03], dtype=jnp.float32)

    energy2 = jax.block_until_ready(
        affine_intensity_forward(target2, moving2, affine2, translation2))
    ref2 = reference_forward(target2, moving2, affine2, translation2)
    if not jnp.allclose(energy2, ref2, rtol=3e-4, atol=1e-2):
        raise AssertionError(f"case2 mismatch: kernel={energy2} ref={ref2}")

    # Case 3: HW not a multiple of 128 (exercises the pixel padding + validity
    # masking) with a transform that pushes samples out of bounds (zeros
    # padding path).
    C3, H3, W3 = 2, 10, 10
    target3 = jax.random.normal(k7, (C3, H3, W3), dtype=jnp.float32)
    moving3 = jax.random.normal(k8, (C3, H3, W3), dtype=jnp.float32)
    affine3 = jnp.array([[1.10, 0.20], [-0.15, 0.90]], dtype=jnp.float32)
    translation3 = jnp.array([0.30, -0.25], dtype=jnp.float32)

    energy3 = jax.block_until_ready(
        affine_intensity_forward(target3, moving3, affine3, translation3))
    ref3 = reference_forward(target3, moving3, affine3, translation3)
    if not jnp.allclose(energy3, ref3, rtol=3e-4, atol=1e-2):
        raise AssertionError(f"case3 mismatch: kernel={energy3} ref={ref3}")

    print("KERNEL_OK")
</pallas_src>

<mosaic_0001>
module attributes {stable_mosaic.version = 11 : i64} {
  func.func @kernel(%arg0: i32, %arg1: memref<2x3xf32, #tpu.memory_space<smem>>, %arg2: memref<3x128xf32, #tpu.memory_space<vmem>>, %arg3: memref<8x128xf32, #tpu.memory_space<vmem>>, %arg4: memref<32x256xf32, #tpu.memory_space<vmem>>, %arg5: memref<1x128xf32, #tpu.memory_space<vmem>>) attributes {dimension_semantics = [#tpu.dimension_semantics<parallel>], iteration_bounds = array<i64: 2>, scalar_prefetch = 0 : i64, scratch_operands = 0 : i64, tpu.core_type = #tpu.core_type<tc>, window_params = [{transform_indices = @transform_0, window_bounds = array<i64: 2, 3>}, {transform_indices = @transform_1, window_bounds = array<i64: 3, 128>}, {transform_indices = @transform_2, window_bounds = array<i64: 8, 128>}, {pipeline_mode = #tpu.pipeline_mode<synchronous>, transform_indices = @transform_3, window_bounds = array<i64: 32, 256>}, {transform_indices = @transform_4, window_bounds = array<i64: 1, 128>}]} {
    %c0 = arith.constant 0 : index
    %c0_0 = arith.constant 0 : index
    %0 = memref.load %arg1[%c0, %c0_0] : memref<2x3xf32, #tpu.memory_space<smem>>
    %c0_1 = arith.constant 0 : index
    %c1 = arith.constant 1 : index
    %1 = memref.load %arg1[%c0_1, %c1] : memref<2x3xf32, #tpu.memory_space<smem>>
    %c0_2 = arith.constant 0 : index
    %c2 = arith.constant 2 : index
    %2 = memref.load %arg1[%c0_2, %c2] : memref<2x3xf32, #tpu.memory_space<smem>>
    %c1_3 = arith.constant 1 : index
    %c0_4 = arith.constant 0 : index
    %3 = memref.load %arg1[%c1_3, %c0_4] : memref<2x3xf32, #tpu.memory_space<smem>>
    %c1_5 = arith.constant 1 : index
    %c1_6 = arith.constant 1 : index
    %4 = memref.load %arg1[%c1_5, %c1_6] : memref<2x3xf32, #tpu.memory_space<smem>>
    %c1_7 = arith.constant 1 : index
    %c2_8 = arith.constant 2 : index
    %5 = memref.load %arg1[%c1_7, %c2_8] : memref<2x3xf32, #tpu.memory_space<smem>>
    %c0_9 = arith.constant 0 : index
    %c0_10 = arith.constant 0 : index
    %6 = vector.load %arg2[%c0_9, %c0_10] : memref<3x128xf32, #tpu.memory_space<vmem>>, vector<1x128xf32>
    %c1_11 = arith.constant 1 : index
    %c0_12 = arith.constant 0 : index
    %7 = vector.load %arg2[%c1_11, %c0_12] : memref<3x128xf32, #tpu.memory_space<vmem>>, vector<1x128xf32>
    %c2_13 = arith.constant 2 : index
    %c0_14 = arith.constant 0 : index
    %8 = vector.load %arg2[%c2_13, %c0_14] : memref<3x128xf32, #tpu.memory_space<vmem>>, vector<1x128xf32>
    %9 = vector.broadcast %0 : f32 to vector<1x128xf32>
    %10 = arith.mulf %9, %6 : vector<1x128xf32>
    %11 = vector.broadcast %1 : f32 to vector<1x128xf32>
    %12 = arith.mulf %11, %7 : vector<1x128xf32>
    %13 = arith.addf %10, %12 : vector<1x128xf32>
    %14 = vector.broadcast %2 : f32 to vector<1x128xf32>
    %15 = arith.addf %13, %14 : vector<1x128xf32>
    %16 = vector.broadcast %3 : f32 to vector<1x128xf32>
    %17 = arith.mulf %16, %6 : vector<1x128xf32>
    %18 = vector.broadcast %4 : f32 to vector<1x128xf32>
    %19 = arith.mulf %18, %7 : vector<1x128xf32>
    %20 = arith.addf %17, %19 : vector<1x128xf32>
    %21 = vector.broadcast %5 : f32 to vector<1x128xf32>
    %22 = arith.addf %20, %21 : vector<1x128xf32>
    %cst = arith.constant 1.000000e+00 : f32
    %23 = vector.broadcast %cst : f32 to vector<1x128xf32>
    %24 = arith.addf %15, %23 : vector<1x128xf32>
    %cst_15 = arith.constant 7.500000e+00 : f32
    %25 = vector.broadcast %cst_15 : f32 to vector<1x128xf32>
    %26 = arith.mulf %24, %25 : vector<1x128xf32>
    %cst_16 = arith.constant 1.000000e+00 : f32
    %27 = vector.broadcast %cst_16 : f32 to vector<1x128xf32>
    %28 = arith.addf %22, %27 : vector<1x128xf32>
    %cst_17 = arith.constant 7.500000e+00 : f32
    %29 = vector.broadcast %cst_17 : f32 to vector<1x128xf32>
    %30 = arith.mulf %28, %29 : vector<1x128xf32>
    %31 = math.floor %26 : vector<1x128xf32>
    %32 = math.floor %30 : vector<1x128xf32>
    %33 = arith.subf %26, %31 : vector<1x128xf32>
    %34 = arith.subf %30, %32 : vector<1x128xf32>
    %35 = arith.fptosi %31 : vector<1x128xf32> to vector<1x128xi32>
    %36 = arith.fptosi %32 : vector<1x128xf32> to vector<1x128xi32>
    %c0_i32 = arith.constant 0 : i32
    %37 = vector.broadcast %c0_i32 : i32 to vector<1x128xi32>
    %38 = arith.cmpi sge, %35, %37 : vector<1x128xi32>
    %c16_i32 = arith.constant 16 : i32
    %39 = vector.broadcast %c16_i32 : i32 to vector<1x128xi32>
    %40 = arith.cmpi slt, %35, %39 : vector<1x128xi32>
    %41 = arith.andi %38, %40 : vector<1x128xi1>
    %c-1_i32 = arith.constant -1 : i32
    %42 = vector.broadcast %c-1_i32 : i32 to vector<1x128xi32>
    %43 = arith.cmpi sge, %35, %42 : vector<1x128xi32>
    %c15_i32 = arith.constant 15 : i32
    %44 = vector.broadcast %c15_i32 : i32 to vector<1x128xi32>
    %45 = arith.cmpi slt, %35, %44 : vector<1x128xi32>
    %46 = arith.andi %43, %45 : vector<1x128xi1>
    %c0_i32_18 = arith.constant 0 : i32
    %47 = vector.broadcast %c0_i32_18 : i32 to vector<1x128xi32>
    %48 = arith.cmpi sge, %36, %47 : vector<1x128xi32>
    %c16_i32_19 = arith.constant 16 : i32
    %49 = vector.broadcast %c16_i32_19 : i32 to vector<1x128xi32>
    %50 = arith.cmpi slt, %36, %49 : vector<1x128xi32>
    %51 = arith.andi %48, %50 : vector<1x128xi1>
    %c-1_i32_20 = arith.constant -1 : i32
    %52 = vector.broadcast %c-1_i32_20 : i32 to vector<1x128xi32>
    %53 = arith.cmpi sge, %36, %52 : vector<1x128xi32>
    %c15_i32_21 = arith.constant 15 : i32
    %54 = vector.broadcast %c15_i32_21 : i32 to vector<1x128xi32>
    %55 = arith.cmpi slt, %36, %54 : vector<1x128xi32>
    %56 = arith.andi %53, %55 : vector<1x128xi1>
    %cst_22 = arith.constant 1.000000e+00 : f32
    %57 = vector.broadcast %cst_22 : f32 to vector<1x128xf32>
    %58 = arith.subf %57, %33 : vector<1x128xf32>
    %cst_23 = arith.constant 1.000000e+00 : f32
    %59 = vector.broadcast %cst_23 : f32 to vector<1x128xf32>
    %60 = arith.subf %59, %34 : vector<1x128xf32>
    %61 = arith.mulf %58, %60 : vector<1x128xf32>
    %62 = arith.andi %41, %51 : vector<1x128xi1>
    %63 = arith.extui %62 : vector<1x128xi1> to vector<1x128xi32>
    %64 = arith.sitofp %63 : vector<1x128xi32> to vector<1x128xf32>
    %65 = arith.mulf %61, %64 : vector<1x128xf32>
    %66 = arith.mulf %65, %8 : vector<1x128xf32>
    %cst_24 = arith.constant 1.000000e+00 : f32
    %67 = vector.broadcast %cst_24 : f32 to vector<1x128xf32>
    %68 = arith.subf %67, %34 : vector<1x128xf32>
    %69 = arith.mulf %33, %68 : vector<1x128xf32>
    %70 = arith.andi %46, %51 : vector<1x128xi1>
    %71 = arith.extui %70 : vector<1x128xi1> to vector<1x128xi32>
    %72 = arith.sitofp %71 : vector<1x128xi32> to vector<1x128xf32>
    %73 = arith.mulf %69, %72 : vector<1x128xf32>
    %74 = arith.mulf %73, %8 : vector<1x128xf32>
    %cst_25 = arith.constant 1.000000e+00 : f32
    %75 = vector.broadcast %cst_25 : f32 to vector<1x128xf32>
    %76 = arith.subf %75, %33 : vector<1x128xf32>
    %77 = arith.mulf %76, %34 : vector<1x128xf32>
    %78 = arith.andi %41, %56 : vector<1x128xi1>
    %79 = arith.extui %78 : vector<1x128xi1> to vector<1x128xi32>
    %80 = arith.sitofp %79 : vector<1x128xi32> to vector<1x128xf32>
    %81 = arith.mulf %77, %80 : vector<1x128xf32>
    %82 = arith.mulf %81, %8 : vector<1x128xf32>
    %83 = arith.mulf %33, %34 : vector<1x128xf32>
    %84 = arith.andi %46, %56 : vector<1x128xi1>
    %85 = arith.extui %84 : vector<1x128xi1> to vector<1x128xi32>
    %86 = arith.sitofp %85 : vector<1x128xi32> to vector<1x128xf32>
    %87 = arith.mulf %83, %86 : vector<1x128xf32>
    %88 = arith.mulf %87, %8 : vector<1x128xf32>
    %c16_i32_26 = arith.constant 16 : i32
    %89 = vector.broadcast %c16_i32_26 : i32 to vector<1x128xi32>
    %90 = arith.muli %36, %89 : vector<1x128xi32>
    %91 = arith.addi %90, %35 : vector<1x128xi32>
    %c0_i32_27 = arith.constant 0 : i32
    %92 = vector.broadcast %c0_i32_27 : i32 to vector<1x128xi32>
    %93 = arith.cmpi slt, %91, %92 : vector<1x128xi32>
    %c256_i32 = arith.constant 256 : i32
    %94 = vector.broadcast %c256_i32 : i32 to vector<1x128xi32>
    %95 = arith.addi %91, %94 : vector<1x128xi32>
    %96 = arith.select %93, %95, %91 : vector<1x128xi1>, vector<1x128xi32>
    %c0_i32_28 = arith.constant 0 : i32
    %c255_i32 = arith.constant 255 : i32
    %97 = vector.broadcast %c0_i32_28 : i32 to vector<1x128xi32>
    %98 = arith.maxsi %97, %96 : vector<1x128xi32>
    %99 = vector.broadcast %c255_i32 : i32 to vector<1x128xi32>
    %100 = arith.minsi %99, %98 : vector<1x128xi32>
    %101 = tpu.iota {dimensions = array<i32: 0>} : vector<256x128xi32>
    %102 = vector.broadcast %100 : vector<1x128xi32> to vector<256x128xi32>
    %103 = arith.cmpi eq, %101, %102 : vector<256x128xi32>
    %104 = arith.extui %103 : vector<256x128xi1> to vector<256x128xi32>
    %105 = arith.sitofp %104 : vector<256x128xi32> to vector<256x128xf32>
    %c0_29 = arith.constant 0 : index
    %c0_30 = arith.constant 0 : index
    %106 = vector.load %arg4[%c0_29, %c0_30] : memref<32x256xf32, #tpu.memory_space<vmem>>, vector<32x256xf32>
    %cst_31 = arith.constant dense<0.000000e+00> : vector<32x128xf32>
    %107 = tpu.matmul %106, %105, %cst_31 {dimension_numbers = #tpu.dot_dimension_numbers<[1], [0], [0], [1], [0, 0, 1, 1], [], []>} : vector<32x256xf32>, vector<256x128xf32>, vector<32x128xf32> -> vector<32x128xf32>
    %108 = vector.extract_strided_slice %107 {offsets = [0, 0], sizes = [8, 128], strides = [1, 1]} : vector<32x128xf32> to vector<8x128xf32>
    %109 = vector.broadcast %66 : vector<1x128xf32> to vector<8x128xf32>
    %110 = arith.mulf %108, %109 : vector<8x128xf32>
    %111 = vector.extract_strided_slice %107 {offsets = [8, 0], sizes = [8, 128], strides = [1, 1]} : vector<32x128xf32> to vector<8x128xf32>
    %112 = vector.broadcast %74 : vector<1x128xf32> to vector<8x128xf32>
    %113 = arith.mulf %111, %112 : vector<8x128xf32>
    %114 = arith.addf %110, %113 : vector<8x128xf32>
    %115 = vector.extract_strided_slice %107 {offsets = [16, 0], sizes = [8, 128], strides = [1, 1]} : vector<32x128xf32> to vector<8x128xf32>
    %116 = vector.broadcast %82 : vector<1x128xf32> to vector<8x128xf32>
    %117 = arith.mulf %115, %116 : vector<8x128xf32>
    %118 = arith.addf %114, %117 : vector<8x128xf32>
    %119 = vector.extract_strided_slice %107 {offsets = [24, 0], sizes = [8, 128], strides = [1, 1]} : vector<32x128xf32> to vector<8x128xf32>
    %120 = vector.broadcast %88 : vector<1x128xf32> to vector<8x128xf32>
    %121 = arith.mulf %119, %120 : vector<8x128xf32>
    %122 = arith.addf %118, %121 : vector<8x128xf32>
    %c0_32 = arith.constant 0 : index
    %c0_33 = arith.constant 0 : index
    %123 = vector.load %arg3[%c0_32, %c0_33] : memref<8x128xf32, #tpu.memory_space<vmem>>, vector<8x128xf32>
    %124 = arith.subf %123, %122 : vector<8x128xf32>
    %125 = arith.mulf %124, %124 : vector<8x128xf32>
    %cst_34 = arith.constant dense<0.000000e+00> : vector<128xf32>
    %126 = vector.multi_reduction <add>, %125, %cst_34 [0] : vector<8x128xf32> to vector<128xf32>
    %127 = vector.shape_cast %126 : vector<128xf32> to vector<1x128xf32>
    %c0_35 = arith.constant 0 : index
    %c0_36 = arith.constant 0 : index
    %128 = vector.load %arg5[%c0_35, %c0_36] : memref<1x128xf32, #tpu.memory_space<vmem>>, vector<1x128xf32>
    tpu.vector_store %arg5[%c0_35, %c0_36], %127 {strides = array<i32>} : memref<1x128xf32, #tpu.memory_space<vmem>>, vector<1x128xf32>,
    return
  }
  func.func @transform_0(%arg0: i32) -> (i32, i32) {
    %c0_i32 = arith.constant 0 : i32
    %c0_i32_0 = arith.constant 0 : i32
    %c0_i32_1 = arith.constant 0 : i32
    return %c0_i32, %c0_i32_0 : i32, i32
  }
  func.func @transform_1(%arg0: i32) -> (i32, i32) {
    %c0_i32 = arith.constant 0 : i32
    %c0_i32_0 = arith.constant 0 : i32
    return %c0_i32, %arg0 : i32, i32
  }
  func.func @transform_2(%arg0: i32) -> (i32, i32) {
    %c0_i32 = arith.constant 0 : i32
    %c0_i32_0 = arith.constant 0 : i32
    return %c0_i32, %arg0 : i32, i32
  }
  func.func @transform_3(%arg0: i32) -> (i32, i32) {
    %c0_i32 = arith.constant 0 : i32
    %c0_i32_0 = arith.constant 0 : i32
    %c0_i32_1 = arith.constant 0 : i32
    return %c0_i32, %c0_i32_0 : i32, i32
  }
  func.func @transform_4(%arg0: i32) -> (i32, i32) {
    %c0_i32 = arith.constant 0 : i32
    %c0_i32_0 = arith.constant 0 : i32
    return %c0_i32, %arg0 : i32, i32
  }
}

</mosaic_0001>

<llo_original>
// kernel: tpu_custom_call.1
$region0: #{tpu_custom_call.1}
  #allocation0 [shape = 'u32[]', space=smem, size = 0x4, offset = 0x4, fixed_abs, tag = 'smem constant byte address 0x4 - core index']
  #allocation1 [shape = 'u32[72,128]{1,0:T(1,128)}', space=vmem, size = 0x9000, scoped, tag = 'internal scratch']
  %s0 = inlined_call_operand.hbm [shape: f32[2,3], index: 0, kind: input, shape index: {}]
  %s1 = inlined_call_operand.hbm [shape: f32[3,256], index: 1, kind: input, shape index: {}]
  %s2 = inlined_call_operand.hbm [shape: f32[8,256], index: 2, kind: input, shape index: {}]
  %s3 = inlined_call_operand.hbm [shape: f32[32,256], index: 3, kind: input, shape index: {}]
  %s4 = inlined_call_operand.hbm [shape: f32[1,256], index: 4, kind: output, shape index: {}]
  %s5 = sld [smem:[#allocation0]]
  $region65: #{tpu_custom_call.1} parent=0
    _
  %s7 = ssub.s32 1, %s5
  %s8 = scalar_select 0, %s7, %s5
  $region1: #{tpu_custom_call.1} parent=0
    #allocation2 [shape = 'u8[1024]{0}', space=smem, size = 0x400, scoped, tag = 'input window, operand 0, single buffered']
    #allocation3 [shape = 's32[2]{0}', space=sflag, size = 0x8, scoped, tag = 'scoped memory for tpu_custom_call.1']
    #allocation4 [shape = 's32[2]{0}', space=sflag, size = 0x8, scoped, tag = 'scoped memory for tpu_custom_call.1']
    #allocation5 [shape = 's32[2]{0}', space=sflag, size = 0x8, scoped, tag = 'scoped memory for tpu_custom_call.1']
    #allocation6 [shape = 'u8[4096]{0}', space=vmem, size = 0x1000, scoped, tag = 'input window, operand 1']
    #allocation7 [shape = 'u8[8192]{0}', space=vmem, size = 0x2000, scoped, tag = 'input window, operand 2']
    #allocation8 [shape = 's32[2]{0}', space=sflag, size = 0x8, scoped, tag = 'scoped memory for tpu_custom_call.1']
    #allocation9 [shape = 'u8[32768]{0}', space=vmem, size = 0x8000, scoped, tag = 'input window, operand 3, single buffered']
    #allocation10 [shape = 'u8[1024]{0}', space=vmem, size = 0x400, scoped, tag = 'output window, operand 0']
    %9 = vsyncpa [#allocation5], 0
    %10 = vsyncpa [#allocation3], 0
    %s11 = scalar_lea.sflag [#allocation3], 1
    %12 = vsyncpa %s11, 0
    %13 = vsyncpa [#allocation8], 0
    %s14 = scalar_lea.sflag [#allocation8], 1
    %15 = vsyncpa %s14, 0
    %16 = vsyncpa [#allocation4], 0
    %s17 = scalar_lea.sflag [#allocation4], 1
    %18 = vsyncpa %s17, 0
    loop: start=0, step=1, limit=4
    $region2: #{tpu_custom_call.1} parent=1 // loop_pre_header
      _
    $region3: #{tpu_custom_call.1} parent=1 // loop_header
      %s20 = sphi 0, %s24
      %p21 = scmp.ge.s32.totalorder %s20, 4
      %s28 = sphi 0, %s28
      %s30 = sphi 0, %s28
      %s31 = sphi 0, %s30
      %s45 = sphi 0, %s31
      %s51 = sphi 0, %s53
      %s54 = sphi 0, %s51
      %s55 = sphi 0, %s54
      %s71 = sphi 0, %s55
      %s77 = sphi 0, %s79
      %s80 = sphi 0, %s77
      %s81 = sphi 0, %s80
      %s97 = sphi 0, %s81
      %s101 = sphi 0, %s101
      %s103 = sphi 0, %s101
      %s104 = sphi 0, %s103
      %s118 = sphi 0, %s104
      %s124 = sphi 0, %s126
      %s127 = sphi 0, %s124
      %s128 = sphi 0, %s127
      %s144 = sphi 0, %s128
    $region4: #{tpu_custom_call.1} parent=1 // loop_header_branch
      %23 = sbr.rel (%p21) target = $region8
    $region5: #{tpu_custom_call.1} parent=1 // loop_body
      %s25 = ssub.s32 %s20, 1
      %s26 = ssub.s32 %s20, 2
      %s27 = sadd.s32 %s20, 1
      %s29 = sadd.s32 %s28, 1
      %p32 = scmp.eq.s32.totalorder %s20, 1
      %p33 = scmp.ne.s32.totalorder %s28, %s30
      %p34 = scmp.eq.s32.totalorder %s20, 0
      %p35 = por %p33, %p34
      %p36 = scmp.ne.s32.totalorder %s28, %s30
      %p37 = scmp.eq.s32.totalorder %s25, 1
      %p38 = por %p36, %p37
      %p39 = scmp.ne.s32.totalorder %s30, %s31
      %p40 = scmp.eq.s32.totalorder %s25, 0
      %p41 = por %p39, %p40
      %p42 = scmp.ne.s32.totalorder %s30, %s31
      %p43 = scmp.eq.s32.totalorder %s26, 1
      %p44 = por %p42, %p43
      %p46 = scmp.ne.s32.totalorder %s31, %s45
      %p47 = scmp.eq.s32.totalorder %s26, 0
      %p48 = por %p46, %p47
      %s49 = ssub.s32 %s20, %s27
      %p50 = scmp.eq.s32.totalorder %s49, 0
      %s52 = sadd.s32 %s51, 1
      %s53 = scalar_select %p50, %s51, %s52
      %p56 = pneg %p50
      %p57 = scmp.eq.s32.totalorder %s20, 1
      %p58 = por %p56, %p57
      %p59 = scmp.ne.s32.totalorder %s51, %s54
      %p60 = scmp.eq.s32.totalorder %s20, 0
      %p61 = por %p59, %p60
      %p62 = scmp.ne.s32.totalorder %s51, %s54
      %p63 = scmp.eq.s32.totalorder %s25, 1
      %p64 = por %p62, %p63
      %p65 = scmp.ne.s32.totalorder %s54, %s55
      %p66 = scmp.eq.s32.totalorder %s25, 0
      %p67 = por %p65, %p66
      %p68 = scmp.ne.s32.totalorder %s54, %s55
      %p69 = scmp.eq.s32.totalorder %s26, 1
      %p70 = por %p68, %p69
      %p72 = scmp.ne.s32.totalorder %s55, %s71
      %p73 = scmp.eq.s32.totalorder %s26, 0
      %p74 = por %p72, %p73
      %s75 = ssub.s32 %s20, %s27
      %p76 = scmp.eq.s32.totalorder %s75, 0
      %s78 = sadd.s32 %s77, 1
      %s79 = scalar_select %p76, %s77, %s78
      %p82 = pneg %p76
      %p83 = scmp.eq.s32.totalorder %s20, 1
      %p84 = por %p82, %p83
      %p85 = scmp.ne.s32.totalorder %s77, %s80
      %p86 = scmp.eq.s32.totalorder %s20, 0
      %p87 = por %p85, %p86
      %p88 = scmp.ne.s32.totalorder %s77, %s80
      %p89 = scmp.eq.s32.totalorder %s25, 1
      %p90 = por %p88, %p89
      %p91 = scmp.ne.s32.totalorder %s80, %s81
      %p92 = scmp.eq.s32.totalorder %s25, 0
      %p93 = por %p91, %p92
      %p94 = scmp.ne.s32.totalorder %s80, %s81
      %p95 = scmp.eq.s32.totalorder %s26, 1
      %p96 = por %p94, %p95
      %p98 = scmp.ne.s32.totalorder %s81, %s97
      %p99 = scmp.eq.s32.totalorder %s26, 0
      %p100 = por %p98, %p99
      %s102 = sadd.s32 %s101, 1
      %p105 = scmp.eq.s32.totalorder %s20, 1
      %p106 = scmp.ne.s32.totalorder %s101, %s103
      %p107 = scmp.eq.s32.totalorder %s20, 0
      %p108 = por %p106, %p107
      %p109 = scmp.ne.s32.totalorder %s101, %s103
      %p110 = scmp.eq.s32.totalorder %s25, 1
      %p111 = por %p109, %p110
      %p112 = scmp.ne.s32.totalorder %s103, %s104
      %p113 = scmp.eq.s32.totalorder %s25, 0
      %p114 = por %p112, %p113
      %p115 = scmp.ne.s32.totalorder %s103, %s104
      %p116 = scmp.eq.s32.totalorder %s26, 1
      %p117 = por %p115, %p116
      %p119 = scmp.ne.s32.totalorder %s104, %s118
      %p120 = scmp.eq.s32.totalorder %s26, 0
      %p121 = por %p119, %p120
      %s122 = ssub.s32 %s20, %s27
      %p123 = scmp.eq.s32.totalorder %s122, 0
      %s125 = sadd.s32 %s124, 1
      %s126 = scalar_select %p123, %s124, %s125
      %p129 = pneg %p123
      %p130 = scmp.eq.s32.totalorder %s20, 1
      %p131 = por %p129, %p130
      %p132 = scmp.ne.s32.totalorder %s124, %s127
      %p133 = scmp.eq.s32.totalorder %s20, 0
      %p134 = por %p132, %p133
      %p135 = scmp.ne.s32.totalorder %s124, %s127
      %p136 = scmp.eq.s32.totalorder %s25, 1
      %p137 = por %p135, %p136
      %p138 = scmp.ne.s32.totalorder %s127, %s128
      %p139 = scmp.eq.s32.totalorder %s25, 0
      %p140 = por %p138, %p139
      %p141 = scmp.ne.s32.totalorder %s127, %s128
      %p142 = scmp.eq.s32.totalorder %s26, 1
      %p143 = por %p141, %p142
      %p145 = scmp.ne.s32.totalorder %s128, %s144
      %p146 = scmp.eq.s32.totalorder %s26, 0
      %p147 = por %p145, %p146
      %p148 = scmp.le.s32.totalorder 1, %s20
      %p149 = scmp.lt.s32.totalorder %s20, 3
      %p150 = pnand %p148, %p149
      %p151 = pneg %p150
      // Predicated region
      $region9: #{tpu_custom_call.1} parent=5 // pred_check
        _
      $region10: #{tpu_custom_call.1} parent=5 // pred_check_branch
        %153 = sbr.rel (%p150) target = $region12
      $region11: #{tpu_custom_call.1} parent=5 // pred_region
        %s154 = ssub.s32 %s20, 1
        // Predicated region
        $region13: #{tpu_custom_call.1} parent=11 // pred_check
          %p155 = pneg %p41
        $region14: #{tpu_custom_call.1} parent=11 // pred_check_branch
          %157 = sbr.rel (%p155) target = $region16
        $region15: #{tpu_custom_call.1} parent=11 // pred_region
          %159 = vsyncadd [#allocation5], 0
          %s161 = sshll.u32 %s0, 4
          %s162 = int_to_ptr.hbm [resolvable:$true] %s161
          %164 = dma.hbm_to_smem %s162, 32, [#allocation2], [#allocation5]
        $region16: #{tpu_custom_call.1} parent=11 // pred_fallthru
          _
        // Predicated region
        $region17: #{tpu_custom_call.1} parent=11 // pred_check
          %p165 = pneg %p114
        $region18: #{tpu_custom_call.1} parent=11 // pred_check_branch
          %167 = sbr.rel (%p165) target = $region20
        $region19: #{tpu_custom_call.1} parent=11 // pred_region
          %169 = vsyncadd [#allocation8], 0
          %s170 = sshll.u32 %s3, 4
          %s171 = int_to_ptr.hbm [resolvable:$true] %s170
          %s172 = sshll.u32 [#allocation9], 4
          %s173 = int_to_ptr.vmem [resolvable:$true] %s172
          %178 = dma.hbm_to_vmem [thread:$0]  %s171, 1024, %s173, [#allocation8], 256, 256, 16
        $region20: #{tpu_custom_call.1} parent=11 // pred_fallthru
          _
      $region12: #{tpu_custom_call.1} parent=5 // pred_fallthru
        _
      %p179 = scmp.lt.s32.totalorder %s20, 2
      // Predicated region
      $region21: #{tpu_custom_call.1} parent=5 // pred_check
        %p180 = pneg %p179
      $region22: #{tpu_custom_call.1} parent=5 // pred_check_branch
        %182 = sbr.rel (%p180) target = $region24
      $region23: #{tpu_custom_call.1} parent=5 // pred_region
        // Predicated region
        $region25: #{tpu_custom_call.1} parent=23 // pred_check
          %p183 = pneg %p61
        $region26: #{tpu_custom_call.1} parent=23 // pred_check_branch
          %185 = sbr.rel (%p183) target = $region28
        $region27: #{tpu_custom_call.1} parent=23 // pred_region
          %s186 = sand.u32 %s51, 1
          %s187 = scalar_lea.sflag [#allocation3], %s186
          %s188 = sand.u32 %s51, 1
          %s189 = smul.addr %s188, 4
          %s190 = scalar_lea.vmem [#allocation6], %s189
          %192 = vsyncadd %s187, 0
          %s193 = smul.addr %s20, 4
          %s194 = scalar_lea.hbm %s1, %s193
          %s196 = sshll.u32 %s194, 4
          %s197 = int_to_ptr.hbm [resolvable:$true] %s196
          %s198 = sshll.u32 %s190, 4
          %s199 = int_to_ptr.vmem [resolvable:$true] %s198
          %201 = dma.hbm_to_vmem [thread:$0]  %s197, 64, %s199, %s187
        $region28: #{tpu_custom_call.1} parent=23 // pred_fallthru
          _
        // Predicated region
        $region29: #{tpu_custom_call.1} parent=23 // pred_check
          %p202 = pneg %p87
        $region30: #{tpu_custom_call.1} parent=23 // pred_check_branch
          %204 = sbr.rel (%p202) target = $region32
        $region31: #{tpu_custom_call.1} parent=23 // pred_region
          %s205 = sand.u32 %s20, 1
          %s206 = scalar_lea.sflag [#allocation8], %s205
          %s207 = sand.u32 %s77, 1
          %s208 = smul.addr %s207, 8
          %s209 = scalar_lea.vmem [#allocation7], %s208
          %211 = vsyncadd %s206, 0
          %s212 = smul.addr %s20, 8
          %s213 = scalar_lea.hbm %s2, %s212
          %s215 = sshll.u32 %s213, 4
          %s216 = int_to_ptr.hbm [resolvable:$true] %s215
          %s217 = sshll.u32 %s209, 4
          %s218 = int_to_ptr.vmem [resolvable:$true] %s217
          %220 = dma.hbm_to_vmem [thread:$0]  %s216, 128, %s218, %s206
        $region32: #{tpu_custom_call.1} parent=23 // pred_fallthru
          _
      $region24: #{tpu_custom_call.1} parent=5 // pred_fallthru
        _
      %p221 = scmp.le.s32.totalorder 1, %s20
      %p222 = scmp.lt.s32.totalorder %s20, 3
      %p223 = pnand %p221, %p222
      %p224 = pneg %p223
      // Predicated region
      $region33: #{tpu_custom_call.1} parent=5 // pred_check
        _
      $region34: #{tpu_custom_call.1} parent=5 // pred_check_branch
        %226 = sbr.rel (%p223) target = $region36
      $region35: #{tpu_custom_call.1} parent=5 // pred_region
        %s227 = ssub.s32 %s20, 1
        // Predicated region
        $region37: #{tpu_custom_call.1} parent=35 // pred_check
          %p228 = pneg %p41
        $region38: #{tpu_custom_call.1} parent=35 // pred_check_branch
          %230 = sbr.rel (%p228) target = $region40
        $region39: #{tpu_custom_call.1} parent=35 // pred_region
          %232 = dma.done [#allocation5], 32
        $region40: #{tpu_custom_call.1} parent=35 // pred_fallthru
          _
        %s233 = sand.u32 %s54, 1
        %s234 = scalar_lea.sflag [#allocation3], %s233
        %s235 = sand.u32 %s54, 1
        %s236 = smul.addr %s235, 4
        %s237 = scalar_lea.vmem [#allocation6], %s236
        // Predicated region
        $region41: #{tpu_custom_call.1} parent=35 // pred_check
          %p238 = pneg %p67
        $region42: #{tpu_custom_call.1} parent=35 // pred_check_branch
          %240 = sbr.rel (%p238) target = $region44
        $region43: #{tpu_custom_call.1} parent=35 // pred_region
          %242 = dma.done %s234, 64
        $region44: #{tpu_custom_call.1} parent=35 // pred_fallthru
          _
        %s243 = sand.u32 %s25, 1
        %s244 = scalar_lea.sflag [#allocation8], %s243
        %s245 = sand.u32 %s80, 1
        %s246 = smul.addr %s245, 8
        %s247 = scalar_lea.vmem [#allocation7], %s246
        // Predicated region
        $region45: #{tpu_custom_call.1} parent=35 // pred_check
          %p248 = pneg %p93
        $region46: #{tpu_custom_call.1} parent=35 // pred_check_branch
          %250 = sbr.rel (%p248) target = $region48
        $region47: #{tpu_custom_call.1} parent=35 // pred_region
          %252 = dma.done %s244, 128
        $region48: #{tpu_custom_call.1} parent=35 // pred_fallthru
          _
        // Predicated region
        $region49: #{tpu_custom_call.1} parent=35 // pred_check
          %p253 = pneg %p114
        $region50: #{tpu_custom_call.1} parent=35 // pred_check_branch
          %255 = sbr.rel (%p253) target = $region52
        $region51: #{tpu_custom_call.1} parent=35 // pred_region
          %257 = dma.done [#allocation8], 1024
        $region52: #{tpu_custom_call.1} parent=35 // pred_fallthru
          _
        %258 = sfence
        %p259 = pneg %p41
        %p260 = pneg %p38
        %s261 = sand.u32 %s54, 1
        %s262 = scalar_lea.sflag [#allocation3], %s261
        %s263 = sand.u32 %s54, 1
        %s264 = smul.addr %s263, 4
        %s265 = scalar_lea.vmem [#allocation6], %s264
        %p266 = pneg %p67
        %p267 = pneg %p64
        %s268 = sand.u32 %s25, 1
        %s269 = scalar_lea.sflag [#allocation8], %s268
        %s270 = sand.u32 %s80, 1
        %s271 = smul.addr %s270, 8
        %s272 = scalar_lea.vmem [#allocation7], %s271
        %p273 = pneg %p93
        %p274 = pneg %p90
        %p275 = pneg %p114
        %p276 = pneg %p111
        %p277 = pneg %p140
        %p278 = pneg %p137
        %s279 = sand.u32 %s127, 1
        %s280 = scalar_lea.sflag [#allocation4], %s279
        %s281 = sand.u32 %s127, 1
        %s282 = scalar_lea.vmem [#allocation10], %s281
        %s283 = sld [smem:[#allocation2]]
        %s284 = sld [smem:[#allocation2 + $0x1]]
        %s285 = sld [smem:[#allocation2 + $0x2]]
        %s286 = sld [smem:[#allocation2 + $0x80]]
        %s287 = sld [smem:[#allocation2 + $0x81]]
        %s288 = sld [smem:[#allocation2 + $0x82]]
        %v289 = vld [vmem:[%s237] sm:$0x1]
        %v290 = vld [vmem:[%s237 + $0x1] sm:$0x1]
        %v291 = vld [vmem:[%s237 + $0x2] sm:$0x1]
        %v292 = vstv %s283
        %v293 = vmul.f32 %v292, %v289
        %v294 = vstv %s284
        %v295 = vmul.f32 %v294, %v290
        %v296 = vadd.f32 %v293, %v295
        %v297 = vstv %s285
        %v298 = vadd.f32 %v296, %v297
        %v299 = vstv %s286
        %v300 = vmul.f32 %v299, %v289
        %v301 = vstv %s287
        %v302 = vmul.f32 %v301, %v290
        %v303 = vadd.f32 %v300, %v302
        %v304 = vstv %s288
        %v305 = vadd.f32 %v303, %v304
        %v306 = vadd.f32 %v298, 1.0
        %v307 = vmul.f32 %v306, 7.5
        %v308 = vadd.f32 %v305, 1.0
        %v309 = vmul.f32 %v308, 7.5
        %v310 = vfloor.f32 %v307
        %v311 = vfloor.f32 %v309
        %v312 = vsub.f32 %v307, %v310
        %v313 = vsub.f32 %v309, %v311
        %v314 = vcvt.f32.s32.to.zero.pseudo %v310
        %v315 = vcvt.f32.s32.to.zero.pseudo %v311
        %vm316 = vcmp.ge.s32.totalorder %v314, 0
        %vm317 = vcmp.lt.s32.totalorder %v314, 16
        %vm318 = vmand %vm316, %vm317
        %vm319 = vcmp.ge.s32.totalorder %v314, 4294967295
        %vm320 = vcmp.lt.s32.totalorder %v314, 15
        %vm321 = vmand %vm319, %vm320
        %vm322 = vcmp.ge.s32.totalorder %v315, 0
        %vm323 = vcmp.lt.s32.totalorder %v315, 16
        %vm324 = vmand %vm322, %vm323
        %vm325 = vcmp.ge.s32.totalorder %v315, 4294967295
        %vm326 = vcmp.lt.s32.totalorder %v315, 15
        %vm327 = vmand %vm325, %vm326
        %v328 = vsub.f32 1.0, %v312
        %v329 = vsub.f32 1.0, %v313
        %v330 = vmul.f32 %v328, %v329
        %vm331 = vmand %vm318, %vm324
        %v332 = vsel %vm331, 1, 0
        %v333 = vcvt.s32.f32 %v332
        %v334 = vmul.f32 %v330, %v333
        %v335 = vmul.f32 %v334, %v291
        %v336 = vmul.f32 %v312, %v329
        %vm337 = vmand %vm321, %vm324
        %v338 = vsel %vm337, 1, 0
        %v339 = vcvt.s32.f32 %v338
        %v340 = vmul.f32 %v336, %v339
        %v341 = vmul.f32 %v340, %v291
        %v342 = vmul.f32 %v328, %v313
        %vm343 = vmand %vm318, %vm327
        %v344 = vsel %vm343, 1, 0
        %v345 = vcvt.s32.f32 %v344
        %v346 = vmul.f32 %v342, %v345
        %v347 = vmul.f32 %v346, %v291
        %v348 = vmul.f32 %v312, %v313
        %vm349 = vmand %vm321, %vm327
        %v350 = vsel %vm349, 1, 0
        %v351 = vcvt.s32.f32 %v350
        %v352 = vmul.f32 %v348, %v351
        %v353 = vmul.f32 %v352, %v291
        %v354 = vmul.u32 %v315, 16
        %v355 = vadd.s32 %v354, %v314
        %vm356 = vcmp.lt.s32.totalorder %v355, 0
        %v357 = vadd.s32 %v355, 256
        %v358 = vsel %vm356, %v357, %v355
        %vm359 = vcmp.gt.s32.totalorder %v358, 0
        %v360 = vsel %vm359, %v358, 0
        %vm361 = vcmp.lt.s32.totalorder %v360, 255
        %v362 = vsel %vm361, %v360, 255
        %v363 = vlaneseq
        %v364 = vshrl.u32 %v363, 7
        %v365 = vadd.s32 %v364, 8
        %v366 = vadd.s32 %v364, 16
        %v367 = vadd.s32 %v364, 24
        %v368 = vadd.s32 %v364, 32
        %v369 = vadd.s32 %v364, 40
        %v370 = vadd.s32 %v364, 48
        %v371 = vadd.s32 %v364, 56
        %v372 = vadd.s32 %v364, 64
        %v373 = vadd.s32 %v364, 72
        %v374 = vadd.s32 %v364, 80
        %v375 = vadd.s32 %v364, 88
        %v376 = vadd.s32 %v364, 96
        %v377 = vadd.s32 %v364, 104
        %v378 = vadd.s32 %v364, 112
        %v379 = vadd.s32 %v364, 120
        %v380 = vadd.s32 %v364, 128
        %v381 = vadd.s32 %v364, 136
        %v382 = vadd.s32 %v364, 144
        %v383 = vadd.s32 %v364, 152
        %v384 = vadd.s32 %v364, 160
        %v385 = vadd.s32 %v364, 168
        %v386 = vadd.s32 %v364, 176
        %v387 = vadd.s32 %v364, 184
        %v388 = vadd.s32 %v364, 192
        %v389 = vadd.s32 %v364, 200
        %v390 = vadd.s32 %v364, 208
        %v391 = vadd.s32 %v364, 216
        %v392 = vadd.s32 %v364, 224
        %v393 = vadd.s32 %v364, 232
        %v394 = vadd.s32 %v364, 240
        %v395 = vadd.s32 %v364, 248
        %v396 = vperm.slane %v362, 0
        %vm397 = vcmp.eq.s32.totalorder %v364, %v396
        %vm398 = vcmp.eq.s32.totalorder %v365, %v396
        %vm399 = vcmp.eq.s32.totalorder %v366, %v396
        %vm400 = vcmp.eq.s32.totalorder %v367, %v396
        %vm401 = vcmp.eq.s32.totalorder %v368, %v396
        %vm402 = vcmp.eq.s32.totalorder %v369, %v396
        %vm403 = vcmp.eq.s32.totalorder %v370, %v396
        %vm404 = vcmp.eq.s32.totalorder %v371, %v396
        %vm405 = vcmp.eq.s32.totalorder %v372, %v396
        %vm406 = vcmp.eq.s32.totalorder %v373, %v396
        %vm407 = vcmp.eq.s32.totalorder %v374, %v396
        %vm408 = vcmp.eq.s32.totalorder %v375, %v396
        %vm409 = vcmp.eq.s32.totalorder %v376, %v396
        %vm410 = vcmp.eq.s32.totalorder %v377, %v396
        %vm411 = vcmp.eq.s32.totalorder %v378, %v396
        %vm412 = vcmp.eq.s32.totalorder %v379, %v396
        %vm413 = vcmp.eq.s32.totalorder %v380, %v396
        %vm414 = vcmp.eq.s32.totalorder %v381, %v396
        %vm415 = vcmp.eq.s32.totalorder %v382, %v396
        %vm416 = vcmp.eq.s32.totalorder %v383, %v396
        %vm417 = vcmp.eq.s32.totalorder %v384, %v396
        %vm418 = vcmp.eq.s32.totalorder %v385, %v396
        %vm419 = vcmp.eq.s32.totalorder %v386, %v396
        %vm420 = vcmp.eq.s32.totalorder %v387, %v396
        %vm421 = vcmp.eq.s32.totalorder %v388, %v396
        %vm422 = vcmp.eq.s32.totalorder %v389, %v396
        %vm423 = vcmp.eq.s32.totalorder %v390, %v396
        %vm424 = vcmp.eq.s32.totalorder %v391, %v396
        %vm425 = vcmp.eq.s32.totalorder %v392, %v396
        %vm426 = vcmp.eq.s32.totalorder %v393, %v396
        %vm427 = vcmp.eq.s32.totalorder %v394, %v396
        %vm428 = vcmp.eq.s32.totalorder %v395, %v396
        %v429 = vsel %vm397, 1, 0
        %v430 = vsel %vm398, 1, 0
        %v431 = vsel %vm399, 1, 0
        %v432 = vsel %vm400, 1, 0
        %v433 = vsel %vm401, 1, 0
        %v434 = vsel %vm402, 1, 0
        %v435 = vsel %vm403, 1, 0
        %v436 = vsel %vm404, 1, 0
        %v437 = vsel %vm405, 1, 0
        %v438 = vsel %vm406, 1, 0
        %v439 = vsel %vm407, 1, 0
        %v440 = vsel %vm408, 1, 0
        %v441 = vsel %vm409, 1, 0
        %v442 = vsel %vm410, 1, 0
        %v443 = vsel %vm411, 1, 0
        %v444 = vsel %vm412, 1, 0
        %v445 = vsel %vm413, 1, 0
        %v446 = vsel %vm414, 1, 0
        %v447 = vsel %vm415, 1, 0
        %v448 = vsel %vm416, 1, 0
        %v449 = vsel %vm417, 1, 0
        %v450 = vsel %vm418, 1, 0
        %v451 = vsel %vm419, 1, 0
        %v452 = vsel %vm420, 1, 0
        %v453 = vsel %vm421, 1, 0
        %v454 = vsel %vm422, 1, 0
        %v455 = vsel %vm423, 1, 0
        %v456 = vsel %vm424, 1, 0
        %v457 = vsel %vm425, 1, 0
        %v458 = vsel %vm426, 1, 0
        %v459 = vsel %vm427, 1, 0
        %v460 = vsel %vm428, 1, 0
        %v461 = vcvt.s32.f32 %v429
        %v462 = vcvt.s32.f32 %v430
        %v463 = vcvt.s32.f32 %v431
        %v464 = vcvt.s32.f32 %v432
        %v465 = vcvt.s32.f32 %v433
        %v466 = vcvt.s32.f32 %v434
        %v467 = vcvt.s32.f32 %v435
        %v468 = vcvt.s32.f32 %v436
        %v469 = vcvt.s32.f32 %v437
        %v470 = vcvt.s32.f32 %v438
        %v471 = vcvt.s32.f32 %v439
        %v472 = vcvt.s32.f32 %v440
        %v473 = vcvt.s32.f32 %v441
        %v474 = vcvt.s32.f32 %v442
        %v475 = vcvt.s32.f32 %v443
        %v476 = vcvt.s32.f32 %v444
        %v477 = vcvt.s32.f32 %v445
        %v478 = vcvt.s32.f32 %v446
        %v479 = vcvt.s32.f32 %v447
        %v480 = vcvt.s32.f32 %v448
        %v481 = vcvt.s32.f32 %v449
        %v482 = vcvt.s32.f32 %v450
        %v483 = vcvt.s32.f32 %v451
        %v484 = vcvt.s32.f32 %v452
        %v485 = vcvt.s32.f32 %v453
        %v486 = vcvt.s32.f32 %v454
        %v487 = vcvt.s32.f32 %v455
        %v488 = vcvt.s32.f32 %v456
        %v489 = vcvt.s32.f32 %v457
        %v490 = vcvt.s32.f32 %v458
        %v491 = vcvt.s32.f32 %v459
        %v492 = vcvt.s32.f32 %v460
        %v493 = vld [vmem:[#allocation9] sm:$0xff]
        %v494 = vld [vmem:[#allocation9 + $0x8] sm:$0xff]
        %v495 = vld [vmem:[#allocation9 + $0x10] sm:$0xff]
        %v496 = vld [vmem:[#allocation9 + $0x18] sm:$0xff]
        %v497 = vld [vmem:[#allocation9 + $0x20] sm:$0xff]
        %v498 = vld [vmem:[#allocation9 + $0x28] sm:$0xff]
        %v499 = vld [vmem:[#allocation9 + $0x30] sm:$0xff]
        %v500 = vld [vmem:[#allocation9 + $0x38] sm:$0xff]
        %501 = vmatpush.msra.mxu0 %v476
        %502 = vmatpush.msra.mxu0 %v475
        %503 = vmatpush.msra.mxu0 %v474
        %504 = vmatpush.msra.mxu0 %v473
        %505 = vmatpush.msra.mxu0 %v472
        %506 = vmatpush.msra.mxu0 %v471
        %507 = vmatpush.msra.mxu0 %v470
        %508 = vmatpush.msra.mxu0 %v469
        %509 = vmatpush.msra.mxu0 %v468
        %510 = vmatpush.msra.mxu0 %v467
        %511 = vmatpush.msra.mxu0 %v466
        %512 = vmatpush.msra.mxu0 %v465
        %513 = vmatpush.msra.mxu0 %v464
        %514 = vmatpush.msra.mxu0 %v463
        %515 = vmatpush.msra.mxu0 %v462
        %516 = vmatpush.msra.mxu0 %v461
        %517 = vmatmul.f32.gmra.mxu0 %v493
        %v518 = vpop.f32.mrf.mxu0
        %v519 = vadd.f32 0.0, %v518
        %520 = vmatmul.f32.gmra.mxu0 %v495
        %v521 = vpop.f32.mrf.mxu0
        %v522 = vadd.f32 0.0, %v521
        %523 = vmatmul.f32.gmra.mxu0 %v497
        %v524 = vpop.f32.mrf.mxu0
        %v525 = vadd.f32 0.0, %v524
        %526 = vmatmul.f32.gmra.mxu0 %v499
        %v527 = vpop.f32.mrf.mxu0
        %v528 = vadd.f32 0.0, %v527
        %529 = vdwg.mxu0
        %530 = vmatpush.msra.mxu0 %v492
        %531 = vmatpush.msra.mxu0 %v491
        %532 = vmatpush.msra.mxu0 %v490
        %533 = vmatpush.msra.mxu0 %v489
        %534 = vmatpush.msra.mxu0 %v488
        %535 = vmatpush.msra.mxu0 %v487
        %536 = vmatpush.msra.mxu0 %v486
        %537 = vmatpush.msra.mxu0 %v485
        %538 = vmatpush.msra.mxu0 %v484
        %539 = vmatpush.msra.mxu0 %v483
        %540 = vmatpush.msra.mxu0 %v482
        %541 = vmatpush.msra.mxu0 %v481
        %542 = vmatpush.msra.mxu0 %v480
        %543 = vmatpush.msra.mxu0 %v479
        %544 = vmatpush.msra.mxu0 %v478
        %545 = vmatpush.msra.mxu0 %v477
        %546 = vmatmul.f32.gmra.mxu0 %v494
        %v547 = vpop.f32.mrf.mxu0
        %v548 = vadd.f32 %v519, %v547
        %549 = vmatmul.f32.gmra.mxu0 %v496
        %v550 = vpop.f32.mrf.mxu0
        %v551 = vadd.f32 %v522, %v550
        %552 = vmatmul.f32.gmra.mxu0 %v498
        %v553 = vpop.f32.mrf.mxu0
        %v554 = vadd.f32 %v525, %v553
        %555 = vmatmul.f32.gmra.mxu0 %v500
        %v556 = vpop.f32.mrf.mxu0
        %v557 = vadd.f32 %v528, %v556
        %558 = vdwg.mxu0
        %v559 = vperm.slane %v335, 0
        %v560 = vmul.f32 %v548, %v559
        %v561 = vperm.slane %v341, 0
        %v562 = vmul.f32 %v551, %v561
        %v563 = vadd.f32 %v560, %v562
        %v564 = vperm.slane %v347, 0
        %v565 = vmul.f32 %v554, %v564
        %v566 = vadd.f32 %v563, %v565
        %v567 = vperm.slane %v353, 0
        %v568 = vmul.f32 %v557, %v567
        %v569 = vadd.f32 %v566, %v568
        %v570 = vld [vmem:[%s247] sm:$0xff]
        %v571 = vsub.f32 %v570, %v569
        %v572 = vmul.f32 %v571, %v571
        %v573 = vrot.slane %v572, 4
        %v574 = vadd.f32 %v572, %v573
        %v575 = vrot.slane %v574, 2
        %v576 = vadd.f32 %v574, %v575
        %v577 = vrot.slane %v576, 1
        %v578 = vadd.f32 %v576, %v577
        %579 = vst [vmem:[%s282] sm:$0x1] %v578
        %s580 = sand.u32 %s127, 1
        %s581 = scalar_lea.sflag [#allocation4], %s580
        %s582 = sand.u32 %s127, 1
        %s583 = scalar_lea.vmem [#allocation10], %s582
        // Predicated region
        $region53: #{tpu_custom_call.1} parent=35 // pred_check
          %p584 = pneg %p137
        $region54: #{tpu_custom_call.1} parent=35 // pred_check_branch
          %586 = sbr.rel (%p584) target = $region56
        $region55: #{tpu_custom_call.1} parent=35 // pred_region
          %588 = vsyncadd %s581, 0
          %s589 = scalar_lea.hbm %s4, %s25
          %s591 = sshll.u32 %s583, 4
          %s592 = int_to_ptr.vmem [resolvable:$true] %s591
          %s593 = sshll.u32 %s589, 4
          %s594 = int_to_ptr.hbm [resolvable:$true] %s593
          %596 = dma.vmem_to_hbm [thread:$0]  %s592, 16, %s594, %s581
        $region56: #{tpu_custom_call.1} parent=35 // pred_fallthru
          _
      $region36: #{tpu_custom_call.1} parent=5 // pred_fallthru
        _
      %p597 = scmp.le.s32.totalorder 2, %s20
      // Predicated region
      $region57: #{tpu_custom_call.1} parent=5 // pred_check
        %p598 = pneg %p597
      $region58: #{tpu_custom_call.1} parent=5 // pred_check_branch
        %600 = sbr.rel (%p598) target = $region60
      $region59: #{tpu_custom_call.1} parent=5 // pred_region
        %s601 = ssub.s32 %s20, 2
        // Predicated region
        $region61: #{tpu_custom_call.1} parent=59 // pred_check
          %p602 = pneg %p143
        $region62: #{tpu_custom_call.1} parent=59 // pred_check_branch
          %604 = sbr.rel (%p602) target = $region64
        $region63: #{tpu_custom_call.1} parent=59 // pred_region
          %s605 = sand.u32 %s128, 1
          %s606 = scalar_lea.sflag [#allocation4], %s605
          %s607 = sand.u32 %s128, 1
          %s608 = scalar_lea.vmem [#allocation10], %s607
          %610 = dma.done %s606, 16
        $region64: #{tpu_custom_call.1} parent=59 // pred_fallthru
          _
      $region60: #{tpu_custom_call.1} parent=5 // pred_fallthru
        _
    $region6: #{tpu_custom_call.1} parent=1 // loop_footer
      %s24 = sadd.s32 1, %s20
    $region7: #{tpu_custom_call.1} parent=1 // loop_footer_branch
      %19 = sbr.rel target = $region3
    $region8: #{tpu_custom_call.1} parent=1 // loop_exit
      _
    %611 = vsyncpa [#allocation3], 1
    %s612 = scalar_lea.sflag [#allocation3], 1
    %613 = vsyncpa %s612, 1
    %614 = vsyncpa [#allocation8], 1
    %s615 = scalar_lea.sflag [#allocation8], 1
    %616 = vsyncpa %s615, 1
    %617 = vsyncpa [#allocation4], 1
    %s618 = scalar_lea.sflag [#allocation4], 1
    %619 = vsyncpa %s618, 1
    %620 = vsyncpa [#allocation5], 1
    %s621 = scalar_lea.sflag [#allocation5], 1
    %622 = vsyncpa %s621, 1

</llo_original>
